<compile_context>
chip_gen: v7x
topology: tpu7x:2x2x1
jax: 0.10.0
libtpu: 0.0.40
codegen_flags: <defaults>
</compile_context>

<pallas_src>
import math
from functools import partial

import jax
import jax.numpy as jnp
from jax.experimental import pallas as pl
from jax.experimental.pallas import tpu as pltpu


def _round_up(x, m):
    return (x + m - 1) // m * m


def _vmem_capacity_bytes():
    try:
        return int(pltpu.get_tpu_info().vmem_capacity_bytes)
    except Exception:
        return 64 * 1024 * 1024  # conservative fallback (v7x per-TC)


def _vmem_limit_bytes(est_bytes, vmem_cap):
    # Generous, but clamped to what the device actually has (v7x: 64 MiB/TC).
    limit = max(32 * 1024 * 1024, int(est_bytes) + 8 * 1024 * 1024)
    limit = min(limit, vmem_cap - 4 * 1024 * 1024)
    return int(max(limit, int(est_bytes) + 1 * 1024 * 1024))


# ----------------------------------------------------------------------------
# Path A: one-hot @ (pre-scaled table) on the MXU  (small vocab, VMEM-resident)
# ----------------------------------------------------------------------------
def _onehot_kernel(tok_ref, table_ref, out_ref):
    # tok_ref  : (1, TN, 1) int32  -- one tile of token ids
    # table_ref: (V, E)     f32/bf16 -- full table, sqrt(E) already folded in
    # out_ref  : (TN, E)
    tn = tok_ref.shape[1]
    v = table_ref.shape[0]
    tok = tok_ref[...].reshape(tn, 1)                                  # (TN, 1)
    col = jax.lax.broadcasted_iota(jnp.int32, (tn, v), dimension=1)    # (TN, V)
    onehot = (tok == col).astype(table_ref.dtype)                      # (TN, V)
    out_ref[...] = jnp.dot(onehot, table_ref[...],
                           preferred_element_type=jnp.float32).astype(out_ref.dtype)


def _onehot_lookup(flat_ids, table_scaled, *, n_pad, g, tile, out_dtype, vmem_cap):
    vocab_size, emb_size = table_scaled.shape
    tok3 = flat_ids.reshape(g, tile, 1)
    out_itemsize = jnp.dtype(out_dtype).itemsize
    table_bytes = vocab_size * emb_size * table_scaled.dtype.itemsize

    # TODO(synk): single-buffer the invariant table (pipeline_mode=pl.Buffered(1))
    # once validated; the constant index map already avoids re-fetch but the
    # pipeline still allocates two table buffers, which we budget for here.
    est_vmem = (2 * table_bytes                                        # table double buffer
                + 2 * tile * emb_size * out_itemsize                   # output double buffer
                + 2 * tile * 4                                         # token tiles
                + tile * vocab_size * table_scaled.dtype.itemsize)     # one-hot intermediate
    vmem_limit = _vmem_limit_bytes(est_vmem, vmem_cap)

    cost = pl.CostEstimate(
        flops=2 * n_pad * vocab_size * emb_size,
        transcendentals=0,
        bytes_accessed=n_pad * 4 + table_bytes + n_pad * emb_size * out_itemsize,
    )

    return pl.pallas_call(
        _onehot_kernel,
        out_shape=jax.ShapeDtypeStruct((n_pad, emb_size), out_dtype),
        grid=(g,),
        in_specs=[
            pl.BlockSpec((1, tile, 1), lambda i: (i, 0, 0)),          # token tile
            pl.BlockSpec((vocab_size, emb_size), lambda i: (0, 0)),   # full table (fetched once)
        ],
        # Output last dim is E: lane-dense (>=128) for any realistic embedding dim.
        out_specs=pl.BlockSpec((tile, emb_size), lambda i: (i, 0)),
        compiler_params=pltpu.CompilerParams(
            dimension_semantics=("parallel",),
            vmem_limit_bytes=vmem_limit),
        cost_estimate=cost,
    )(tok3, table_scaled)


# ----------------------------------------------------------------------------
# Path B: double-buffered DMA row-gather (large vocab, table stays in HBM)
# ----------------------------------------------------------------------------
def _gather_kernel(ids_ref, table_hbm, out_ref, rows_vmem, copy_sems, *, scale, tile):
    # ids_ref  : (N_pad,) int32 in SMEM (scalar prefetch)
    # table_hbm: (V, E) in HBM (memory_space=pl.ANY)
    # out_ref  : (tile, E) VMEM output block
    # rows_vmem: (2, tile, E) VMEM double-buffered row slab
    # copy_sems: (2,) DMA semaphores (one per slot)
    i = pl.program_id(0)
    n_steps = pl.num_programs(0)
    slot = i % 2

    def issue(step, slot_idx):
        base = step * tile

        def body(j, carry):
            row = ids_ref[base + j]
            pltpu.make_async_copy(
                table_hbm.at[pl.ds(row, 1)],
                rows_vmem.at[slot_idx, pl.ds(j, 1)],
                copy_sems.at[slot_idx],
            ).start()
            return carry

        # Unrolled so descriptor issue (scalar + vector-misc slots) overlaps the
        # in-flight DMAs instead of hiding behind an opaque loop.
        jax.lax.fori_loop(0, tile, body, 0, unroll=8)

    # Prime the pipeline: first grid step issues its own slab.
    @pl.when(i == 0)
    def _():
        issue(0, 0)

    # Prefetch tile i+1's rows into the other slot BEFORE waiting on this one
    # (also keeps the SMEM id reads ahead of the .wait()).
    @pl.when(i + 1 < n_steps)
    def _():
        issue(i + 1, 1 - slot)

    # One wait for the whole slab: the DMA semaphore counts bytes, and `tile`
    # single-row copies of E*itemsize equal one (tile, E) copy.  The descriptor
    # here only supplies the byte count (shape-safe for any vocab size).
    pltpu.make_async_copy(
        rows_vmem.at[slot], rows_vmem.at[slot], copy_sems.at[slot]
    ).wait()

    out_ref[...] = (rows_vmem[slot] * scale).astype(out_ref.dtype)
    # TODO(synk): chunk the id stream per tile (bounded SMEM window) for very
    # large N — a full scalar-prefetched 1-D SMEM array pads to next_pow2(4N).


def _gather_lookup(flat_ids, emb_table, *, n_pad, g, tile, scale, out_dtype, vmem_cap):
    vocab_size, emb_size = emb_table.shape
    out_itemsize = jnp.dtype(out_dtype).itemsize
    row_bytes = emb_size * emb_table.dtype.itemsize

    est_vmem = (2 * tile * row_bytes                      # double-buffered row slab
                + 2 * tile * emb_size * out_itemsize)     # output double buffer
    vmem_limit = _vmem_limit_bytes(est_vmem, vmem_cap)

    cost = pl.CostEstimate(
        flops=n_pad * emb_size,
        transcendentals=0,
        bytes_accessed=n_pad * 4 + n_pad * row_bytes + n_pad * emb_size * out_itemsize,
    )

    grid_spec = pltpu.PrefetchScalarGridSpec(
        num_scalar_prefetch=1,
        grid=(g,),
        in_specs=[pl.BlockSpec(memory_space=pl.ANY)],                  # table stays in HBM
        out_specs=pl.BlockSpec((tile, emb_size), lambda i, ids: (i, 0)),
        scratch_shapes=[
            pltpu.VMEM((2, tile, emb_size), emb_table.dtype),
            pltpu.SemaphoreType.DMA((2,)),
        ],
    )

    return pl.pallas_call(
        partial(_gather_kernel, scale=scale, tile=tile),
        out_shape=jax.ShapeDtypeStruct((n_pad, emb_size), out_dtype),
        grid_spec=grid_spec,
        compiler_params=pltpu.CompilerParams(
            # Cross-step prefetch chain (prime at i==0, data for step i issued at
            # step i-1) requires in-order execution -> arbitrary, not parallel.
            dimension_semantics=("arbitrary",),
            vmem_limit_bytes=vmem_limit),
        cost_estimate=cost,
    )(flat_ids, emb_table)


# ----------------------------------------------------------------------------
# Public wrapper (matches TokenEmbedding.forward)
# ----------------------------------------------------------------------------
def token_embedding(tokens, emb_table, *, tile_n=None, method="auto", compute_dtype=None):
    """Pallas equivalent of TokenEmbedding.forward: emb_table[tokens] * sqrt(E).

    tile_n        : tokens per grid step (default derived from VMEM capacity).
    method        : "auto" | "onehot" | "gather".
    compute_dtype : MXU dtype for the one-hot path (e.g. jnp.bfloat16 on v6e/v7x).
    """
    vocab_size, emb_size = emb_table.shape
    out_dtype = emb_table.dtype
    out_itemsize = jnp.dtype(out_dtype).itemsize
    scale = math.sqrt(emb_size)
    orig_shape = tokens.shape

    flat = tokens.reshape(-1).astype(jnp.int32)
    n = flat.shape[0]

    vmem_cap = _vmem_capacity_bytes()
    cdt = jnp.dtype(compute_dtype) if compute_dtype is not None else jnp.dtype(out_dtype)

    # Default tile: bigger slabs on 128 MiB parts (v5e/v6e), smaller on v7x (64 MiB/TC).
    if tile_n is None:
        tile_n = 512 if vmem_cap >= 96 * 1024 * 1024 else 256

    # Effective tile: multiple of 8; avoid pad/slice when N already fits, but keep
    # >= 2 grid steps for moderately large N so v7x's two TensorCores both work.
    if n <= tile_n:
        if n >= 512:
            tile = _round_up(-(-n // 2), 8)
        else:
            tile = _round_up(max(n, 8), 8)
    else:
        tile = _round_up(tile_n, 8)
    n_pad = _round_up(n, tile)
    if n_pad != n:
        flat = jnp.pad(flat, (0, n_pad - n))   # pad id 0 is a valid row; padded rows sliced off
    g = n_pad // tile

    if method == "auto":
        row_bytes = emb_size * out_itemsize
        resident = (2 * vocab_size * emb_size * cdt.itemsize        # table (pipeline double-buffers)
                    + tile * vocab_size * cdt.itemsize              # one-hot intermediate
                    + 2 * tile * emb_size * out_itemsize)           # output double buffer
        budget = int(0.45 * vmem_cap)
        # Narrow rows -> per-row DMA descriptor cost dominates the gather path, so
        # the MXU one-hot wins despite extra flops (cutoff kept modest for v5e's MXU).
        vocab_cutoff = 8192 if row_bytes <= 1024 else 2048
        method = "onehot" if (vocab_size <= vocab_cutoff and resident <= budget) else "gather"

    if method == "onehot":
        # Fold sqrt(E) into the table cast (f32 multiply before any bf16 rounding);
        # XLA fuses the multiply into the same V*E stream as the astype.
        table_scaled = (emb_table.astype(jnp.float32) * scale).astype(cdt)
        out = _onehot_lookup(flat, table_scaled, n_pad=n_pad, g=g, tile=tile,
                             out_dtype=out_dtype, vmem_cap=vmem_cap)
    elif method == "gather":
        out = _gather_lookup(flat, emb_table, n_pad=n_pad, g=g, tile=tile,
                             scale=scale, out_dtype=out_dtype, vmem_cap=vmem_cap)
    else:
        raise ValueError(f"unknown method: {method!r}")

    if n_pad != n:
        out = out[:n]
    return out.reshape(*orig_shape, emb_size)


if __name__ == "__main__":
    key = jax.random.PRNGKey(0)
    k1, k2, k3, k4 = jax.random.split(key, 4)

    # --- 1) Small config matching the module (one-hot MXU path, f32 exact) ---
    batch, seq, vocab_size, emb_size = 2, 8, 16, 32
    emb_table = jax.random.normal(k1, (vocab_size, emb_size), dtype=jnp.float32)
    tokens = jax.random.randint(k2, (batch, seq), 0, vocab_size, dtype=jnp.int32)

    out = jax.block_until_ready(token_embedding(tokens, emb_table))
    ref = emb_table[tokens] * math.sqrt(emb_size)
    assert out.shape == (batch, seq, emb_size)
    assert jnp.allclose(out, ref, atol=1e-5, rtol=1e-5)

    # --- 2) bf16 MXU path (v6e/v7x fast path), bf16-rounding tolerance ---
    out_bf16 = jax.block_until_ready(
        token_embedding(tokens, emb_table, compute_dtype=jnp.bfloat16))
    assert jnp.allclose(out_bf16, ref, atol=0.2, rtol=0.02)

    # --- 3) Larger vocab: double-buffered DMA row-gather + non-aligned N (padding) ---
    vocab2, emb2 = 512, 256
    table2 = jax.random.normal(k3, (vocab2, emb2), dtype=jnp.float32)
    tokens2 = jax.random.randint(k4, (3, 171), 0, vocab2, dtype=jnp.int32)
    out2 = jax.block_until_ready(token_embedding(tokens2, table2, method="gather"))
    ref2 = table2[tokens2] * math.sqrt(emb2)
    assert out2.shape == (3, 171, emb2)
    assert jnp.allclose(out2, ref2, atol=1e-5, rtol=1e-5)

    print("KERNEL_OK")
</pallas_src>

<mosaic_0001>
module attributes {stable_mosaic.version = 11 : i64} {
  func.func @_onehot_kernel(%arg0: i32, %arg1: memref<1x16x1xi32, #tpu.memory_space<vmem>>, %arg2: memref<16x32xf32, #tpu.memory_space<vmem>>, %arg3: memref<16x32xf32, #tpu.memory_space<vmem>>) attributes {dimension_semantics = [#tpu.dimension_semantics<parallel>], iteration_bounds = array<i64: 1>, scalar_prefetch = 0 : i64, scratch_operands = 0 : i64, tpu.core_type = #tpu.core_type<tc>, window_params = [{transform_indices = @transform_0, window_bounds = array<i64: 1, 16, 1>}, {pipeline_mode = #tpu.pipeline_mode<synchronous>, transform_indices = @transform_1, window_bounds = array<i64: 16, 32>}, {transform_indices = @transform_2, window_bounds = array<i64: 16, 32>}]} {
    %c0 = arith.constant 0 : index
    %c0_0 = arith.constant 0 : index
    %c0_1 = arith.constant 0 : index
    %0 = vector.load %arg1[%c0, %c0_0, %c0_1] : memref<1x16x1xi32, #tpu.memory_space<vmem>>, vector<1x16x1xi32>
    %1 = vector.shape_cast %0 : vector<1x16x1xi32> to vector<16x1xi32>
    %2 = tpu.iota {dimensions = array<i32: 1>} : vector<16x16xi32>
    %3 = vector.broadcast %1 : vector<16x1xi32> to vector<16x16xi32>
    %4 = arith.cmpi eq, %3, %2 : vector<16x16xi32>
    %5 = arith.extui %4 : vector<16x16xi1> to vector<16x16xi32>
    %6 = arith.sitofp %5 : vector<16x16xi32> to vector<16x16xf32>
    %c0_2 = arith.constant 0 : index
    %c0_3 = arith.constant 0 : index
    %7 = vector.load %arg2[%c0_2, %c0_3] : memref<16x32xf32, #tpu.memory_space<vmem>>, vector<16x32xf32>
    %cst = arith.constant dense<0.000000e+00> : vector<16x32xf32>
    %8 = tpu.matmul %6, %7, %cst {dimension_numbers = #tpu.dot_dimension_numbers<[1], [0], [0], [1], [0, 0, 1, 1], [], []>} : vector<16x16xf32>, vector<16x32xf32>, vector<16x32xf32> -> vector<16x32xf32>
    %c0_4 = arith.constant 0 : index
    %c0_5 = arith.constant 0 : index
    %9 = vector.load %arg3[%c0_4, %c0_5] : memref<16x32xf32, #tpu.memory_space<vmem>>, vector<16x32xf32>
    tpu.vector_store %arg3[%c0_4, %c0_5], %8 {strides = array<i32>} : memref<16x32xf32, #tpu.memory_space<vmem>>, vector<16x32xf32>,
    return
  }
  func.func @transform_0(%arg0: i32) -> (i32, i32, i32) {
    %c0_i32 = arith.constant 0 : i32
    %c0_i32_0 = arith.constant 0 : i32
    %c0_i32_1 = arith.constant 0 : i32
    return %arg0, %c0_i32, %c0_i32_0 : i32, i32, i32
  }
  func.func @transform_1(%arg0: i32) -> (i32, i32) {
    %c0_i32 = arith.constant 0 : i32
    %c0_i32_0 = arith.constant 0 : i32
    %c0_i32_1 = arith.constant 0 : i32
    return %c0_i32, %c0_i32_0 : i32, i32
  }
  func.func @transform_2(%arg0: i32) -> (i32, i32) {
    %c0_i32 = arith.constant 0 : i32
    %c0_i32_0 = arith.constant 0 : i32
    return %arg0, %c0_i32 : i32, i32
  }
}

</mosaic_0001>

<llo_original>
// kernel: tpu_custom_call.1
$region0: #{tpu_custom_call.1}
  #allocation0 [shape = 'u32[]', space=smem, size = 0x4, offset = 0x4, fixed_abs, tag = 'smem constant byte address 0x4 - core index']
  #allocation1 [shape = 'u32[144,128]{1,0:T(1,128)}', space=vmem, size = 0x12000, scoped, tag = 'internal scratch']
  %s0 = inlined_call_operand.vmem [shape: s32[1,16,1], index: 0, kind: input, shape index: {}]
  %s1 = inlined_call_operand.vmem [shape: f32[16,32], index: 1, kind: input, shape index: {}]
  %s2 = inlined_call_operand.hbm [shape: f32[16,32], index: 2, kind: output, shape index: {}]
  %s3 = sld [smem:[#allocation0]]
  $region18: #{tpu_custom_call.1} parent=0
    _
  %s5 = ssub.s32 1, %s3
  %s6 = scalar_select 0, %s5, %s3
  $region1: #{tpu_custom_call.1} parent=0
    #allocation2 [shape = 'u8[8192]{0}', space=vmem, size = 0x2000, scoped, tag = 'output window, operand 0, single buffered']
    #allocation3 [shape = 's32[1]{0}', space=sflag, size = 0x4, scoped, tag = 'scoped memory for tpu_custom_call.1']
    %7 = vsyncpa [#allocation3], 0
    // Predicated region
    $region2: #{tpu_custom_call.1} parent=1 // pred_check
      _
    $region3: #{tpu_custom_call.1} parent=1 // pred_check_branch
      %9 = sbr.rel (0) target = $region5
    $region4: #{tpu_custom_call.1} parent=1 // pred_region
      _
    $region5: #{tpu_custom_call.1} parent=1 // pred_fallthru
      _
    // Predicated region
    $region6: #{tpu_custom_call.1} parent=1 // pred_check
      _
    $region7: #{tpu_custom_call.1} parent=1 // pred_check_branch
      %11 = sbr.rel (0) target = $region9
    $region8: #{tpu_custom_call.1} parent=1 // pred_region
      _
    $region9: #{tpu_custom_call.1} parent=1 // pred_fallthru
      _
    %v12 = vld [vmem:[%s0] sm:$0xff]
    %v13 = vld [vmem:[%s0 + $0x8] sm:$0xff]
    %v14 = vlaneseq
    %v15 = vand.u32 %v14, 127
    %16 = vset.pattern.permute.xlu0 0
    %17 = vperm.xlu0 %16, %v12
    %v18 = vpop.permute.xlu0 %17
    %19 = vset.pattern.permute.xlu0 0
    %20 = vperm.xlu0 %19, %v13
    %v21 = vpop.permute.xlu0 %20
    %vm22 = vcmp.eq.s32.totalorder %v18, %v15
    %vm23 = vcmp.eq.s32.totalorder %v21, %v15
    %v24 = vsel %vm22, 1, 0
    %v25 = vsel %vm23, 1, 0
    %v26 = vcvt.s32.f32 %v24
    %v27 = vcvt.s32.f32 %v25
    %v28 = vld [vmem:[%s1] sm:$0xff]
    %v29 = vld [vmem:[%s1 + $0x8] sm:$0xff]
    %vm30 = vcmask 130048
    %v32 = vsel %vm30, %v26, 0
    %v35 = vsel %vm30, %v27, 0
    %37 = vmatprep.subr.mxu0 0.0
    %38 = vmatpush1.msra.mxu0 %v28
    %39 = vmatprep.subr.mxu0 0.0
    %40 = vmatpush1.msra.mxu0 %v29
    %41 = vmatprep.subr.mxu0 0.0
    %42 = vmatpush1.msra.mxu0 0.0
    %43 = vmatprep.subr.mxu0 0.0
    %44 = vmatpush1.msra.mxu0 0.0
    %45 = vmatprep.subr.mxu0 0.0
    %46 = vmatpush1.msra.mxu0 0.0
    %47 = vmatprep.subr.mxu0 0.0
    %48 = vmatpush1.msra.mxu0 0.0
    %49 = vmatprep.subr.mxu0 0.0
    %50 = vmatpush1.msra.mxu0 0.0
    %51 = vmatprep.subr.mxu0 0.0
    %52 = vmatpush1.msra.mxu0 0.0
    %53 = vmatprep.subr.mxu0 0.0
    %54 = vmatpush1.msra.mxu0 0.0
    %55 = vmatprep.subr.mxu0 0.0
    %56 = vmatpush1.msra.mxu0 0.0
    %57 = vmatprep.subr.mxu0 0.0
    %58 = vmatpush1.msra.mxu0 0.0
    %59 = vmatprep.subr.mxu0 0.0
    %60 = vmatpush1.msra.mxu0 0.0
    %61 = vmatprep.subr.mxu0 0.0
    %62 = vmatpush1.msra.mxu0 0.0
    %63 = vmatprep.subr.mxu0 0.0
    %64 = vmatpush1.msra.mxu0 0.0
    %65 = vmatprep.subr.mxu0 0.0
    %66 = vmatpush1.msra.mxu0 0.0
    %67 = vmatprep.subr.mxu0 0.0
    %68 = vmatpush1.msra.mxu0 0.0
    %69 = vmatprep.subr.mxu0 0.0
    %70 = vmatpush1.msra.mxu0 0.0
    %71 = vmatprep.subr.mxu0 0.0
    %72 = vmatpush1.msra.mxu0 0.0
    %73 = vmatprep.subr.mxu0 0.0
    %74 = vmatpush1.msra.mxu0 0.0
    %75 = vmatprep.subr.mxu0 0.0
    %76 = vmatpush1.msra.mxu0 0.0
    %77 = vmatprep.subr.mxu0 0.0
    %78 = vmatpush1.msra.mxu0 0.0
    %79 = vmatprep.subr.mxu0 0.0
    %80 = vmatpush1.msra.mxu0 0.0
    %81 = vmatprep.subr.mxu0 0.0
    %82 = vmatpush1.msra.mxu0 0.0
    %83 = vmatprep.subr.mxu0 0.0
    %84 = vmatpush1.msra.mxu0 0.0
    %85 = vmatprep.subr.mxu0 0.0
    %86 = vmatpush1.msra.mxu0 0.0
    %87 = vmatprep.subr.mxu0 0.0
    %88 = vmatpush1.msra.mxu0 0.0
    %89 = vmatprep.subr.mxu0 0.0
    %90 = vmatpush1.msra.mxu0 0.0
    %91 = vmatprep.subr.mxu0 0.0
    %92 = vmatpush1.msra.mxu0 0.0
    %93 = vmatprep.subr.mxu0 0.0
    %94 = vmatpush1.msra.mxu0 0.0
    %95 = vmatprep.subr.mxu0 0.0
    %96 = vmatpush1.msra.mxu0 0.0
    %97 = vmatprep.subr.mxu0 0.0
    %98 = vmatpush1.msra.mxu0 0.0
    %99 = vmatprep.subr.mxu0 0.0
    %100 = vmatpush1.msra.mxu0 0.0
    %101 = vmatprep.mubr.f32.mxu0 0.0
    %102 = vmatmul.mubr.f32.gmra.mrb[0].mxu0 %v32
    %v103 = vpop.f32.mrb[0].mxu0
    %v104 = vadd.f32 0.0, %v103
    %v105 = vpop.f32.mrb[0].mxu0
    %106 = vmatprep.mubr.f32.mxu0 0.0
    %107 = vmatmul.mubr.f32.gmra.mrb[0].mxu0 %v35
    %v108 = vpop.f32.mrb[0].mxu0
    %v109 = vadd.f32 0.0, %v108
    %v110 = vpop.f32.mrb[0].mxu0
    %111 = vdwg.mxu0
    %vm112 = vcmask 261120
    %113 = vst.msk [vmem:[#allocation2] sm:$0xff] %vm112, %v104
    %114 = vst.msk [vmem:[#allocation2 + $0x8] sm:$0xff] %vm112, %v109
    // Predicated region
    $region10: #{tpu_custom_call.1} parent=1 // pred_check
      _
    $region11: #{tpu_custom_call.1} parent=1 // pred_check_branch
      %116 = sbr.rel (0) target = $region13
    $region12: #{tpu_custom_call.1} parent=1 // pred_region
      %s118 = ssub.s32 256, 256
      %119 = vsyncadd [#allocation3], %s118
      %s120 = sshll.u32 [#allocation2], 4
      %s121 = int_to_ptr.vmem [resolvable:$true] %s120
      %126 = dma.vmem_to_hbm [thread:$0]  %s121, 256, %s2, [#allocation3], 128, 128, 8
    $region13: #{tpu_custom_call.1} parent=1 // pred_fallthru
      _
    // Predicated region
    $region14: #{tpu_custom_call.1} parent=1 // pred_check
      _
    $region15: #{tpu_custom_call.1} parent=1 // pred_check_branch
      %128 = sbr.rel (0) target = $region17
    $region16: #{tpu_custom_call.1} parent=1 // pred_region
      %129 = dma.done [#allocation3], 256
    $region17: #{tpu_custom_call.1} parent=1 // pred_fallthru
      _
    %130 = vsyncpa [#allocation3], 1

</llo_original>
